<compile_context>
chip_gen: v5e
topology: v5e:2x2
jax: 0.10.0
libtpu: 0.0.40
codegen_flags: <defaults>
</compile_context>

<pallas_src>
import functools

import jax
import jax.numpy as jnp
from jax import lax
from jax.experimental import pallas as pl
from jax.experimental.pallas import tpu as pltpu

KERNEL_SIZE = 7
PAD = 3                          # "same" padding for kernel_size=7
_LANE = 128
_SUBLANE = 8


# ------------------------------ tile selection --------------------------------

def _round_down(v, m):
    return (v // m) * m


def _vmem_capacity_bytes():
    try:
        return int(pltpu.get_tpu_info().vmem_capacity_bytes)
    except Exception:
        return 64 << 20          # conservative fallback (v7x per-core VMEM)


def _vmem_limit_bytes(in_flight_bytes, vmem_cap):
    # generous but bounded: cover the double-buffered working set + margin,
    # stay well under the physical per-core VMEM.
    return int(min(int(vmem_cap * 0.85),
                   max(32 << 20, in_flight_bytes + (16 << 20))))


def _pick_lane_tile(total_cols, bytes_per_col, budget, min_grid_steps):
    """Largest multiple-of-128 lane tile within `budget`, small enough to leave
    >= min_grid_steps blocks along L (when 128-col granularity allows)."""
    if total_cols <= _LANE:
        return total_cols                       # full-dim block is always legal
    by_budget = max(_LANE, _round_down(budget // max(1, bytes_per_col), _LANE))
    by_steps = max(_LANE, _round_down(total_cols // max(1, min_grid_steps), _LANE))
    lane_tile = min(by_budget, by_steps)
    if lane_tile >= total_cols:
        return total_cols
    return lane_tile


def _pick_stage1_tiles(B, C, L, x_itemsize, budget):
    b_tile = min(B, _SUBLANE)                   # fill vreg sublanes
    while b_tile > 1 and b_tile * C * _LANE * x_itemsize > budget:
        b_tile //= 2                            # huge C: shrink batch tile first
    nb = pl.cdiv(B, b_tile)
    min_steps = max(1, -(-4 // nb))             # ceil(4 / nb): >=2 steps per v7x TC
    l_tile = _pick_lane_tile(L, b_tile * C * x_itemsize, budget, min_steps)
    return b_tile, l_tile


def _pick_stage2_tiles(B, L, stats_itemsize, out_itemsize, budget):
    b_tile = min(B, _SUBLANE)
    nb = pl.cdiv(B, b_tile)
    min_steps = max(1, -(-4 // nb))
    # center + left + right neighbour blocks for 2 channels, plus the output
    bytes_per_col = b_tile * (6 * stats_itemsize + out_itemsize)
    l_tile = _pick_lane_tile(L, bytes_per_col, budget, min_steps)
    return b_tile, l_tile


# --------------------------- stage 1: channel stats ---------------------------

def _channel_stats_kernel(x_ref, avg_ref, max_ref):
    # x_ref: (B_TILE, C, L_TILE) in the input dtype.
    x = x_ref[...]
    c = x_ref.shape[1]
    s = jnp.sum(x, axis=1, dtype=jnp.float32)   # widening fused into the reduce
    m = jnp.max(x, axis=1)                      # max is exact in the input dtype
    avg_ref[...] = (s * (1.0 / c)).astype(avg_ref.dtype)
    max_ref[...] = m.astype(max_ref.dtype)


# --------------------- stage 2: 7-tap conv (2->1) + sigmoid -------------------

def _conv_sigmoid_kernel(w_ref, *refs, true_len):
    # refs: (avg_c, [avg_l, avg_r,] max_c, [max_l, max_r,]) + o_ref
    # each stats ref: (B_TILE, L_TILE); w_ref: (2, 7) f32 in SMEM; o_ref: (B_TILE, L_TILE)
    o_ref = refs[-1]
    stats_refs = refs[:-1]
    bt, lt = stats_refs[0].shape
    li = pl.program_id(1)
    g0 = li * lt                                 # global column of this tile's col 0

    # Global-column validity mask over the halo-extended window.  It zeroes
    # (a) the zero "same" padding outside [0, L), (b) garbage lanes of a partial
    # last block, and (c) the clamped-neighbour halos at the global edges.
    gcol = g0 - PAD + lax.broadcasted_iota(jnp.int32, (bt, lt + 2 * PAD), 1)
    valid = (gcol >= 0) & (gcol < true_len)

    def extended(c_ref, l_ref, r_ref):
        center = c_ref[...].astype(jnp.float32)
        if l_ref is None:                        # single L block: halos are pure padding
            halo_l = jnp.zeros((bt, PAD), jnp.float32)
            halo_r = jnp.zeros((bt, PAD), jnp.float32)
        else:
            halo_l = l_ref[:, lt - PAD:].astype(jnp.float32)   # last 3 cols of left block
            halo_r = r_ref[:, :PAD].astype(jnp.float32)        # first 3 cols of right block
        ext = jnp.concatenate([halo_l, center, halo_r], axis=-1)  # (bt, lt + 6)
        return jnp.where(valid, ext, 0.0)

    if len(stats_refs) == 2:
        avg_e = extended(stats_refs[0], None, None)
        max_e = extended(stats_refs[1], None, None)
    else:
        avg_e = extended(stats_refs[0], stats_refs[1], stats_refs[2])
        max_e = extended(stats_refs[3], stats_refs[4], stats_refs[5])

    # Hoist the 14 conv taps (SMEM scalar reads) out of the unrolled loop.
    w_avg = [w_ref[0, k] for k in range(KERNEL_SIZE)]
    w_max = [w_ref[1, k] for k in range(KERNEL_SIZE)]

    acc = jnp.zeros((bt, lt), jnp.float32)
    for k in range(KERNEL_SIZE):                 # static, unrolled cross-correlation
        acc = acc + w_avg[k] * avg_e[:, k:k + lt] + w_max[k] * max_e[:, k:k + lt]

    o_ref[...] = jax.nn.sigmoid(acc).astype(o_ref.dtype)


# --------------------------------- wrapper ------------------------------------

def spatial_attention(x, w, *, b_tile=None, l_tile=None,
                      conv_b_tile=None, conv_l_tile=None):
    """x: (B, C, L); w: (2, 7) = Conv1d(2, 1, 7, bias=False) weight (out-ch squeezed)."""
    B, C, L = x.shape
    assert w.shape == (2, KERNEL_SIZE), w.shape

    x_itemsize = jnp.dtype(x.dtype).itemsize
    stats_dtype = x.dtype if x.dtype in (jnp.float32, jnp.bfloat16) else jnp.float32
    stats_itemsize = jnp.dtype(stats_dtype).itemsize
    out_itemsize = x_itemsize

    vmem_cap = _vmem_capacity_bytes()
    budget = max(2 << 20, min(12 << 20, vmem_cap // 8))    # bytes per input block

    # ---------------- stage 1: per-position mean/max over channels ----------------
    bt1, lt1 = _pick_stage1_tiles(B, C, L, x_itemsize, budget)
    if b_tile is not None:
        bt1 = min(b_tile, B)
    if l_tile is not None:
        lt1 = min(l_tile, L)

    s1_inflight = 2 * bt1 * C * lt1 * x_itemsize + 4 * bt1 * lt1 * stats_itemsize
    avg, mx = pl.pallas_call(
        _channel_stats_kernel,
        out_shape=(jax.ShapeDtypeStruct((B, L), stats_dtype),
                   jax.ShapeDtypeStruct((B, L), stats_dtype)),
        grid=(pl.cdiv(B, bt1), pl.cdiv(L, lt1)),
        in_specs=[pl.BlockSpec((bt1, C, lt1), lambda b, l: (b, 0, l))],
        out_specs=(pl.BlockSpec((bt1, lt1), lambda b, l: (b, l)),
                   pl.BlockSpec((bt1, lt1), lambda b, l: (b, l))),
        compiler_params=pltpu.CompilerParams(
            dimension_semantics=("parallel", "parallel"),
            vmem_limit_bytes=_vmem_limit_bytes(s1_inflight, vmem_cap)),
        cost_estimate=pl.CostEstimate(
            flops=int(2 * B * C * L),
            transcendentals=0,
            bytes_accessed=int(B * C * L * x_itemsize + 2 * B * L * stats_itemsize)),
    )(x)

    # ---------------- stage 2: 7-tap Conv1d(2->1) + sigmoid -----------------------
    bt2, lt2 = _pick_stage2_tiles(B, L, stats_itemsize, out_itemsize, budget)
    if conv_b_tile is not None:
        bt2 = min(conv_b_tile, B)
    if conv_l_tile is not None:
        lt2 = min(conv_l_tile, L)
    nb2, nl2 = pl.cdiv(B, bt2), pl.cdiv(L, lt2)

    w32 = w.astype(jnp.float32)
    smem_spec = pl.BlockSpec(memory_space=pltpu.MemorySpace.SMEM)
    center_spec = pl.BlockSpec((bt2, lt2), lambda b, l: (b, l))

    if nl2 == 1:
        in_specs = [smem_spec, center_spec, center_spec]
        args = (w32, avg, mx)
        n_streams = 2
    else:
        left_spec = pl.BlockSpec((bt2, lt2),
                                 lambda b, l: (b, jnp.maximum(l - 1, 0)))
        right_spec = pl.BlockSpec((bt2, lt2),
                                  lambda b, l: (b, jnp.minimum(l + 1, nl2 - 1)))
        in_specs = [smem_spec, center_spec, left_spec, right_spec,
                    center_spec, left_spec, right_spec]
        args = (w32, avg, avg, avg, mx, mx, mx)
        n_streams = 6

    s2_inflight = (2 * n_streams * bt2 * lt2 * stats_itemsize
                   + 2 * bt2 * lt2 * out_itemsize
                   + 8 * bt2 * (lt2 + 2 * PAD) * 4)          # f32 temps margin
    y = pl.pallas_call(
        functools.partial(_conv_sigmoid_kernel, true_len=L),
        out_shape=jax.ShapeDtypeStruct((B, L), x.dtype),
        grid=(nb2, nl2),
        in_specs=in_specs,
        out_specs=pl.BlockSpec((bt2, lt2), lambda b, l: (b, l)),
        compiler_params=pltpu.CompilerParams(
            dimension_semantics=("parallel", "parallel"),
            vmem_limit_bytes=_vmem_limit_bytes(s2_inflight, vmem_cap)),
        cost_estimate=pl.CostEstimate(
            flops=int(4 * KERNEL_SIZE * B * L),
            transcendentals=int(B * L),
            bytes_accessed=int(n_streams * B * L * stats_itemsize
                               + B * L * out_itemsize)),
    )(*args)

    return y[:, None, :]                                     # (B, 1, L), free reshape


def reference_forward(x, w):
    """Pure-JAX reference mirroring the PyTorch module."""
    avg = jnp.mean(x, axis=1, keepdims=True)
    mx = jnp.max(x, axis=1, keepdims=True)
    feats = jnp.concatenate([avg, mx], axis=1)               # (B, 2, L)
    y = jax.lax.conv_general_dilated(
        feats, w[None],                                      # (1, 2, 7) OIH
        window_strides=(1,), padding=[(PAD, PAD)],
        dimension_numbers=("NCH", "OIH", "NCH"))
    return jax.nn.sigmoid(y)


if __name__ == "__main__":
    key = jax.random.PRNGKey(0)
    kx1, kx2, kw = jax.random.split(key, 3)

    # Deterministic init matching nn.Conv1d(2, 1, 7, bias=False) weight
    # (out=1, in=2, k=7); kaiming-uniform-like bound = 1/sqrt(fan_in=2*7).
    bound = 1.0 / float(jnp.sqrt(2.0 * KERNEL_SIZE))
    w = jax.random.uniform(kw, (2, KERNEL_SIZE), dtype=jnp.float32,
                           minval=-bound, maxval=bound)

    # Case 1: small shapes (single block in both stages, zero-halo path).
    B, C, L = 2, 4, 16
    x = jax.random.normal(kx1, (B, C, L), dtype=jnp.float32)
    out = jax.block_until_ready(spatial_attention(x, w))
    ref = reference_forward(x, w)
    assert out.shape == (B, 1, L), out.shape
    assert jnp.allclose(out, ref, atol=1e-5, rtol=1e-5), \
        float(jnp.max(jnp.abs(out - ref)))

    # Case 2: multi-tile path: stage-1 grid (2, 3), stage-2 grid (2, 3) with a
    # partial last L block (320 = 2*128 + 64) exercising neighbour halos and the
    # global-column masking.
    B2, C2, L2 = 4, 8, 320
    x2 = jax.random.normal(kx2, (B2, C2, L2), dtype=jnp.float32)
    out2 = jax.block_until_ready(
        spatial_attention(x2, w, b_tile=2, l_tile=128,
                          conv_b_tile=2, conv_l_tile=128))
    ref2 = reference_forward(x2, w)
    assert out2.shape == (B2, 1, L2), out2.shape
    assert jnp.allclose(out2, ref2, atol=1e-5, rtol=1e-5), \
        float(jnp.max(jnp.abs(out2 - ref2)))

    print("KERNEL_OK")
</pallas_src>

<mosaic_0001>
module attributes {stable_mosaic.version = 11 : i64} {
  func.func @_channel_stats_kernel(%arg0: i32, %arg1: i32, %arg2: memref<2x4x16xf32, #tpu.memory_space<vmem>>, %arg3: memref<2x16xf32, #tpu.memory_space<vmem>>, %arg4: memref<2x16xf32, #tpu.memory_space<vmem>>) attributes {dimension_semantics = [#tpu.dimension_semantics<parallel>, #tpu.dimension_semantics<parallel>], iteration_bounds = array<i64: 1, 1>, scalar_prefetch = 0 : i64, scratch_operands = 0 : i64, tpu.core_type = #tpu.core_type<tc>, window_params = [{transform_indices = @transform_0, window_bounds = array<i64: 2, 4, 16>}, {transform_indices = @transform_1, window_bounds = array<i64: 2, 16>}, {transform_indices = @transform_2, window_bounds = array<i64: 2, 16>}]} {
    %c0 = arith.constant 0 : index
    %c0_0 = arith.constant 0 : index
    %c0_1 = arith.constant 0 : index
    %0 = vector.load %arg2[%c0, %c0_0, %c0_1] : memref<2x4x16xf32, #tpu.memory_space<vmem>>, vector<2x4x16xf32>
    %cst = arith.constant dense<0.000000e+00> : vector<2x16xf32>
    %1 = vector.multi_reduction <add>, %0, %cst [1] : vector<2x4x16xf32> to vector<2x16xf32>
    %cst_2 = arith.constant dense<0xFF800000> : vector<2x16xf32>
    %2 = vector.multi_reduction <maximumf>, %0, %cst_2 [1] : vector<2x4x16xf32> to vector<2x16xf32>
    %cst_3 = arith.constant 2.500000e-01 : f32
    %3 = vector.broadcast %cst_3 : f32 to vector<2x16xf32>
    %4 = arith.mulf %1, %3 : vector<2x16xf32>
    %c0_4 = arith.constant 0 : index
    %c0_5 = arith.constant 0 : index
    %5 = vector.load %arg3[%c0_4, %c0_5] : memref<2x16xf32, #tpu.memory_space<vmem>>, vector<2x16xf32>
    tpu.vector_store %arg3[%c0_4, %c0_5], %4 {strides = array<i32>} : memref<2x16xf32, #tpu.memory_space<vmem>>, vector<2x16xf32>,
    %c0_6 = arith.constant 0 : index
    %c0_7 = arith.constant 0 : index
    %6 = vector.load %arg4[%c0_6, %c0_7] : memref<2x16xf32, #tpu.memory_space<vmem>>, vector<2x16xf32>
    tpu.vector_store %arg4[%c0_6, %c0_7], %2 {strides = array<i32>} : memref<2x16xf32, #tpu.memory_space<vmem>>, vector<2x16xf32>,
    return
  }
  func.func @transform_0(%arg0: i32, %arg1: i32) -> (i32, i32, i32) {
    %c0_i32 = arith.constant 0 : i32
    %c0_i32_0 = arith.constant 0 : i32
    return %arg0, %c0_i32, %arg1 : i32, i32, i32
  }
  func.func @transform_1(%arg0: i32, %arg1: i32) -> (i32, i32) {
    %c0_i32 = arith.constant 0 : i32
    return %arg0, %arg1 : i32, i32
  }
  func.func @transform_2(%arg0: i32, %arg1: i32) -> (i32, i32) {
    %c0_i32 = arith.constant 0 : i32
    return %arg0, %arg1 : i32, i32
  }
}

</mosaic_0001>

<llo_original>
// kernel: tpu_custom_call.1
$region0: #{tpu_custom_call.1}
  #allocation0 [shape = 'u32[]', space=smem, size = 0x4, offset = 0x4, fixed_abs, tag = 'smem constant byte address 0x4 - core index']
  #allocation1 [shape = 'u32[72,128]{1,0:T(1,128)}', space=vmem, size = 0x9000, scoped, tag = 'internal scratch']
  %s0 = inlined_call_operand.hbm [shape: f32[2,4,16], index: 0, kind: input, shape index: {}]
  %s1 = inlined_call_operand.hbm [shape: f32[2,16], index: 1, kind: output, shape index: {0}]
  %s2 = inlined_call_operand.hbm [shape: f32[2,16], index: 2, kind: output, shape index: {1}]
  %3 = xla_tuple %s1, %s2
  %s4 = sld [smem:[#allocation0]]
  $region26: #{tpu_custom_call.1} parent=0
    _
  %s6 = ssub.s32 1, %s4
  %s7 = scalar_select 0, %s6, %s4
  $region1: #{tpu_custom_call.1} parent=0
    #allocation2 [shape = 'u8[4096]{0}', space=vmem, size = 0x1000, scoped, tag = 'input window, operand 0, single buffered']
    #allocation3 [shape = 's32[1]{0}', space=sflag, size = 0x4, scoped, tag = 'scoped memory for tpu_custom_call.1']
    #allocation4 [shape = 's32[1]{0}', space=sflag, size = 0x4, scoped, tag = 'scoped memory for tpu_custom_call.1']
    #allocation5 [shape = 'u8[1024]{0}', space=vmem, size = 0x400, scoped, tag = 'output window, operand 0, single buffered']
    #allocation6 [shape = 'u8[1024]{0}', space=vmem, size = 0x400, scoped, tag = 'output window, operand 1, single buffered']
    #allocation7 [shape = 's32[1]{0}', space=sflag, size = 0x4, scoped, tag = 'scoped memory for tpu_custom_call.1']
    %8 = vsyncpa [#allocation3], 0
    %9 = vsyncpa [#allocation4], 0
    %10 = vsyncpa [#allocation7], 0
    // Predicated region
    $region2: #{tpu_custom_call.1} parent=1 // pred_check
      _
    $region3: #{tpu_custom_call.1} parent=1 // pred_check_branch
      %12 = sbr.rel (0) target = $region5
    $region4: #{tpu_custom_call.1} parent=1 // pred_region
      %14 = vsyncadd [#allocation3], 0
      %s15 = sshll.u32 %s0, 4
      %s16 = int_to_ptr.hbm [resolvable:$true] %s15
      %s17 = sshll.u32 [#allocation2], 4
      %s18 = int_to_ptr.vmem [resolvable:$true] %s17
      %23 = dma.hbm_to_vmem [thread:$0]  %s16, 128, %s18, [#allocation3], 64, 64, 4
    $region5: #{tpu_custom_call.1} parent=1 // pred_fallthru
      _
    // Predicated region
    $region6: #{tpu_custom_call.1} parent=1 // pred_check
      _
    $region7: #{tpu_custom_call.1} parent=1 // pred_check_branch
      %25 = sbr.rel (0) target = $region9
    $region8: #{tpu_custom_call.1} parent=1 // pred_region
      %27 = dma.done [#allocation3], 128
    $region9: #{tpu_custom_call.1} parent=1 // pred_fallthru
      _
    %v28 = vld [vmem:[#allocation2] sm:$0xf]
    %v29 = vld [vmem:[#allocation2 + $0x4] sm:$0xf]
    %vm30 = vcmask 125952
    %v31 = vsel %vm30, %v28, 0.0
    %v32 = vrot.slane %v31, 4
    %v33 = vadd.f32 %v31, %v32
    %v34 = vrot.slane %v33, 2
    %v35 = vadd.f32 %v33, %v34
    %v36 = vrot.slane %v35, 1
    %v37 = vadd.f32 %v35, %v36
    %v38 = vsel %vm30, %v29, 0.0
    %v39 = vrot.slane %v38, 4
    %v40 = vadd.f32 %v38, %v39
    %v41 = vrot.slane %v40, 2
    %v42 = vadd.f32 %v40, %v41
    %v43 = vrot.slane %v42, 1
    %v44 = vadd.f32 %v42, %v43
    %v45 = vsel %vm30, %v28, -inf
    %v46 = vrot.slane %v45, 4
    %v47 = vmax.f32 %v45, %v46
    %v48 = vrot.slane %v47, 2
    %v49 = vmax.f32 %v47, %v48
    %v50 = vrot.slane %v49, 1
    %v51 = vmax.f32 %v49, %v50
    %v52 = vsel %vm30, %v29, -inf
    %v53 = vrot.slane %v52, 4
    %v54 = vmax.f32 %v52, %v53
    %v55 = vrot.slane %v54, 2
    %v56 = vmax.f32 %v54, %v55
    %v57 = vrot.slane %v56, 1
    %v58 = vmax.f32 %v56, %v57
    %v59 = vmul.f32 %v37, 0.25
    %v60 = vmul.f32 %v44, 0.25
    %vm63 = vcmask 1041409
    %v64 = vsel %vm63, %v60, %v59
    %vm66 = vcmask 123904
    %67 = vst.msk [vmem:[#allocation5] sm:$0x3] %vm66, %v64
    %v70 = vsel %vm63, %v58, %v51
    %72 = vst.msk [vmem:[#allocation6] sm:$0x3] %vm66, %v70
    // Predicated region
    $region10: #{tpu_custom_call.1} parent=1 // pred_check
      _
    $region11: #{tpu_custom_call.1} parent=1 // pred_check_branch
      %74 = sbr.rel (0) target = $region13
    $region12: #{tpu_custom_call.1} parent=1 // pred_region
      %76 = vsyncadd [#allocation4], 0
      %s78 = sshll.u32 [#allocation5], 4
      %s79 = int_to_ptr.vmem [resolvable:$true] %s78
      %s80 = sshll.u32 %s1, 4
      %s81 = int_to_ptr.hbm [resolvable:$true] %s80
      %83 = dma.vmem_to_hbm [thread:$0]  %s79, 32, %s81, [#allocation4]
    $region13: #{tpu_custom_call.1} parent=1 // pred_fallthru
      _
    // Predicated region
    $region14: #{tpu_custom_call.1} parent=1 // pred_check
      _
    $region15: #{tpu_custom_call.1} parent=1 // pred_check_branch
      %85 = sbr.rel (0) target = $region17
    $region16: #{tpu_custom_call.1} parent=1 // pred_region
      %87 = vsyncadd [#allocation7], 0
      %s89 = sshll.u32 [#allocation6], 4
      %s90 = int_to_ptr.vmem [resolvable:$true] %s89
      %s91 = sshll.u32 %s2, 4
      %s92 = int_to_ptr.hbm [resolvable:$true] %s91
      %94 = dma.vmem_to_hbm [thread:$0]  %s90, 32, %s92, [#allocation7]
    $region17: #{tpu_custom_call.1} parent=1 // pred_fallthru
      _
    // Predicated region
    $region18: #{tpu_custom_call.1} parent=1 // pred_check
      _
    $region19: #{tpu_custom_call.1} parent=1 // pred_check_branch
      %96 = sbr.rel (0) target = $region21
    $region20: #{tpu_custom_call.1} parent=1 // pred_region
      %98 = dma.done [#allocation4], 32
    $region21: #{tpu_custom_call.1} parent=1 // pred_fallthru
      _
    // Predicated region
    $region22: #{tpu_custom_call.1} parent=1 // pred_check
      _
    $region23: #{tpu_custom_call.1} parent=1 // pred_check_branch
      %100 = sbr.rel (0) target = $region25
    $region24: #{tpu_custom_call.1} parent=1 // pred_region
      %102 = dma.done [#allocation7], 32
    $region25: #{tpu_custom_call.1} parent=1 // pred_fallthru
      _
    %103 = vsyncpa [#allocation3], 1
    %104 = vsyncpa [#allocation4], 1
    %105 = vsyncpa [#allocation7], 1

</llo_original>
